<compile_context>
chip_gen: v7x
topology: tpu7x:2x2x1
jax: 0.10.0
libtpu: 0.0.40
codegen_flags: <defaults>
</compile_context>

<pallas_src>
import math

import jax
import jax.numpy as jnp
from jax.experimental import pallas as pl
from jax.experimental.pallas import tpu as pltpu


def _rup(x, m):
    return ((x + m - 1) // m) * m


# ----------------------------- Pallas kernel --------------------------------
def _make_kernel(cfg):
    """Builds the fused-MLP kernel with static (Python int) slab offsets."""
    F = cfg["F"]            # num_probes (unpadded contraction dim of layer 1)
    E1_p, E2_p, H_p = cfg["E1_p"], cfg["E2_p"], cfg["H_p"]
    NP, NC = cfg["NP"], cfg["NC"]
    r1, r2, r3, r4, r5 = cfg["r1"], cfg["r2"], cfg["r3"], cfg["r4"], cfg["r5"]

    def kernel(x_ref, w_ref, b_ref, pin_ref, temp_ref):
        cdt = w_ref.dtype                      # MXU operand dtype (f32 or bf16)
        x = x_ref[...].astype(cdt)             # (bm, F) — lane-exact, no padding

        # encoder layer 1: (bm, F) @ (F, E1_p), bias/ReLU in f32
        h = jnp.dot(x, w_ref[r1:r1 + F, 0:E1_p],
                    preferred_element_type=jnp.float32)
        h = jnp.maximum(h + b_ref[0:1, 0:E1_p], 0.0)
        # encoder layer 2 (zero-padded rows/lanes make full-width contraction exact)
        h = jnp.dot(h.astype(cdt), w_ref[r2:r3, 0:E2_p],
                    preferred_element_type=jnp.float32)
        h = jnp.maximum(h + b_ref[1:2, 0:E2_p], 0.0)
        # fused head hidden layers: [pin_hidden | temp_hidden]
        g = jnp.dot(h.astype(cdt), w_ref[r3:r4, 0:H_p],
                    preferred_element_type=jnp.float32)
        g = jnp.maximum(g + b_ref[2:3, 0:H_p], 0.0).astype(cdt)
        # head output layers (no activation), written lane-exact
        p = jnp.dot(g, w_ref[r4:r5, 0:NP], preferred_element_type=jnp.float32)
        pin_ref[...] = (p + b_ref[3:4, 0:NP]).astype(pin_ref.dtype)
        t = jnp.dot(g, w_ref[r5:r5 + H_p, 0:NC], preferred_element_type=jnp.float32)
        temp_ref[...] = (t + b_ref[4:5, 0:NC]).astype(temp_ref.dtype)

    return kernel


# ------------------------------ param packing -------------------------------
def pack_params(params, *, compute_dtype=jnp.float32):
    """Fuse heads, pad hidden dims to 128 lanes, pack weights/biases into 2 slabs."""
    we1, be1 = params["we1"], params["be1"]
    we2, be2 = params["we2"], params["be2"]
    wp1, bp1 = params["wp1"], params["bp1"]
    wp2, bp2 = params["wp2"], params["bp2"]
    wt1, bt1 = params["wt1"], params["bt1"]
    wt2, bt2 = params["wt2"], params["bt2"]

    F, E1 = we1.shape
    E2 = we2.shape[1]
    P1, NP = wp2.shape
    T1, NC = wt2.shape
    H = P1 + T1

    E1_p, E2_p, H_p = _rup(E1, 128), _rup(E2, 128), _rup(H, 128)
    W_LANE = max(E1_p, E2_p, H_p, _rup(NP, 128), _rup(NC, 128))

    # fused head hidden layer: [wp1 | wt1]  -> (E2, H)
    w3 = jnp.concatenate([wp1, wt1], axis=1)
    b3 = jnp.concatenate([bp1.reshape(-1), bt1.reshape(-1)])
    # head output layers expanded to full-H contraction (zero rows), so the
    # kernel never lane-slices the fused hidden activation.
    w4p = jnp.zeros((H, NP), jnp.float32).at[:P1, :].set(wp2)
    w4t = jnp.zeros((H, NC), jnp.float32).at[P1:, :].set(wt2)

    # static row offsets inside the single weight slab
    r1 = 0
    r2 = r1 + _rup(F, 8)          # layer-1 chunk: only num_probes rows (sublane-rounded)
    r3 = r2 + E1_p
    r4 = r3 + E2_p
    r5 = r4 + H_p
    R = r5 + H_p

    w_slab = jnp.zeros((R, W_LANE), jnp.float32)
    w_slab = w_slab.at[r1:r1 + F, :E1].set(we1)
    w_slab = w_slab.at[r2:r2 + E1, :E2].set(we2)
    w_slab = w_slab.at[r3:r3 + E2, :H].set(w3)
    w_slab = w_slab.at[r4:r4 + H, :NP].set(w4p)
    w_slab = w_slab.at[r5:r5 + H, :NC].set(w4t)
    w_slab = w_slab.astype(compute_dtype)

    # bias slab kept f32: bias-add/ReLU run in f32 on all chips
    b_slab = jnp.zeros((8, W_LANE), jnp.float32)
    for i, b in enumerate((be1, be2, b3, bp2, bt2)):
        bflat = b.reshape(-1)
        b_slab = b_slab.at[i, :bflat.shape[0]].set(bflat)

    cfg = dict(F=F, E1_p=E1_p, E2_p=E2_p, H_p=H_p, NP=NP, NC=NC,
               r1=r1, r2=r2, r3=r3, r4=r4, r5=r5)
    return {"w": w_slab, "b": b_slab, "cfg": cfg}


# --------------------------------- wrapper -----------------------------------
def _choose_tiling(B, cap):
    """Rows-per-grid-step and number of steps (>=2 steps for B>16 -> v7x 2 TCs)."""
    if B <= 16:
        return B, 1                               # single block == full batch dim
    n = max(2, pl.cdiv(B, cap))                   # at least 2 steps
    bm = min(cap, _rup(pl.cdiv(B, n), 16))        # sublane-granule rows per step
    return bm, pl.cdiv(B, bm)                     # ragged last block handled by Pallas


def mlp_forward(x, packed, *, batch_block=2048):
    """Fused MLPModel forward. x: (B, num_probes) -> (pin_power, temperature)."""
    cfg = packed["cfg"]
    F, NP, NC = cfg["F"], cfg["NP"], cfg["NC"]
    w_slab, b_slab = packed["w"], packed["b"]

    B = x.shape[0]
    assert x.shape[1] == F
    bm, steps = _choose_tiling(B, batch_block)

    kernel = _make_kernel(cfg)

    # NOTE: weight/bias specs always map to block (0,0) -> resident across the
    # grid.  (pipeline_mode=pl.Buffered(1) would shave their second buffer;
    # left at the default as a low-priority, low-risk omission.)
    pin, temp = pl.pallas_call(
        kernel,
        out_shape=(jax.ShapeDtypeStruct((B, NP), jnp.float32),
                   jax.ShapeDtypeStruct((B, NC), jnp.float32)),
        grid_spec=pltpu.PrefetchScalarGridSpec(
            num_scalar_prefetch=0,
            grid=(steps,),
            in_specs=[
                pl.BlockSpec((bm, F), lambda i: (i, 0)),        # x tile, lane-exact
                pl.BlockSpec(w_slab.shape, lambda i: (0, 0)),   # resident weights
                pl.BlockSpec(b_slab.shape, lambda i: (0, 0)),   # resident biases
            ],
            out_specs=[
                pl.BlockSpec((bm, NP), lambda i: (i, 0)),       # pin_power
                pl.BlockSpec((bm, NC), lambda i: (i, 0)),       # temperature
            ],
        ),
        compiler_params=pltpu.CompilerParams(
            dimension_semantics=("parallel",)),                  # v7x: 2 TCs
    )(x, w_slab, b_slab)
    return pin, temp


# ------------------------ deterministic parameter init ----------------------
def _init_linear(key, fan_in, fan_out):
    """Mimics torch.nn.Linear default init: U(-1/sqrt(in), 1/sqrt(in))."""
    kw, kb = jax.random.split(key)
    bound = 1.0 / math.sqrt(fan_in)
    w = jax.random.uniform(kw, (fan_in, fan_out), jnp.float32, -bound, bound)
    b = jax.random.uniform(kb, (1, fan_out), jnp.float32, -bound, bound)
    return w, b


def make_params(key, num_probes, num_pins, num_cells,
                encoder_sizes, pin_power_head_sizes, temperature_head_sizes):
    keys = jax.random.split(key, 6)
    params = {}
    params["we1"], params["be1"] = _init_linear(keys[0], num_probes, encoder_sizes[0])
    params["we2"], params["be2"] = _init_linear(keys[1], encoder_sizes[0], encoder_sizes[1])
    params["wp1"], params["bp1"] = _init_linear(keys[2], encoder_sizes[-1], pin_power_head_sizes[0])
    params["wp2"], params["bp2"] = _init_linear(keys[3], pin_power_head_sizes[-1], num_pins)
    params["wt1"], params["bt1"] = _init_linear(keys[4], encoder_sizes[-1], temperature_head_sizes[0])
    params["wt2"], params["bt2"] = _init_linear(keys[5], temperature_head_sizes[-1], num_cells)
    return params


# ------------------------------- reference ----------------------------------
def mlp_forward_ref(x, p):
    h = jnp.maximum(x @ p["we1"] + p["be1"], 0.0)
    h = jnp.maximum(h @ p["we2"] + p["be2"], 0.0)
    pp = jnp.maximum(h @ p["wp1"] + p["bp1"], 0.0) @ p["wp2"] + p["bp2"]
    tt = jnp.maximum(h @ p["wt1"] + p["bt1"], 0.0) @ p["wt2"] + p["bt2"]
    return pp, tt


# --------------------------------- main --------------------------------------
if __name__ == "__main__":
    # Small, forward-consistent sizes.
    num_probes = 8
    num_pins = 16
    num_cells = 32
    encoder_sizes = [32, 32]
    pin_power_head_sizes = [32]
    temperature_head_sizes = [32]
    batch = 8

    key = jax.random.PRNGKey(0)
    k_params, k_x, k_x2 = jax.random.split(key, 3)

    params = make_params(k_params, num_probes, num_pins, num_cells,
                         encoder_sizes, pin_power_head_sizes, temperature_head_sizes)
    probe_temperature = jax.random.normal(k_x, (batch, num_probes), jnp.float32)

    pin_ref, temp_ref = mlp_forward_ref(probe_temperature, params)

    # ---- f32 path (exact semantics), tiny batch -> single grid step ----
    packed_f32 = pack_params(params, compute_dtype=jnp.float32)
    pin_power, temperature = mlp_forward(probe_temperature, packed_f32)
    jax.block_until_ready((pin_power, temperature))

    assert pin_power.shape == (batch, num_pins)
    assert temperature.shape == (batch, num_cells)
    assert jnp.allclose(pin_power, pin_ref, atol=1e-4, rtol=1e-4)
    assert jnp.allclose(temperature, temp_ref, atol=1e-4, rtol=1e-4)

    # ---- larger batch: multi-step grid + ragged last block (no wrapper padding) ----
    B2 = 200
    x2 = jax.random.normal(k_x2, (B2, num_probes), jnp.float32)
    pin2_ref, temp2_ref = mlp_forward_ref(x2, params)
    pin2, temp2 = mlp_forward(x2, packed_f32, batch_block=128)   # 2 steps of 112 rows
    jax.block_until_ready((pin2, temp2))
    assert pin2.shape == (B2, num_pins) and temp2.shape == (B2, num_cells)
    assert jnp.allclose(pin2, pin2_ref, atol=1e-4, rtol=1e-4)
    assert jnp.allclose(temp2, temp2_ref, atol=1e-4, rtol=1e-4)

    # ---- bf16 MXU-operand path (weights bf16; x stays f32 in HBM, cast in-kernel) ----
    packed_bf16 = pack_params(params, compute_dtype=jnp.bfloat16)
    pin_bf16, temp_bf16 = mlp_forward(probe_temperature, packed_bf16)
    jax.block_until_ready((pin_bf16, temp_bf16))
    assert jnp.allclose(pin_bf16, pin_ref, atol=5e-2, rtol=5e-2)
    assert jnp.allclose(temp_bf16, temp_ref, atol=5e-2, rtol=5e-2)

    print("KERNEL_OK")
</pallas_src>

<mosaic_0001>
module attributes {stable_mosaic.version = 11 : i64} {
  func.func @kernel(%arg0: i32, %arg1: memref<8x8xf32, #tpu.memory_space<vmem>>, %arg2: memref<520x128xf32, #tpu.memory_space<vmem>>, %arg3: memref<8x128xf32, #tpu.memory_space<vmem>>, %arg4: memref<8x16xf32, #tpu.memory_space<vmem>>, %arg5: memref<8x32xf32, #tpu.memory_space<vmem>>) attributes {dimension_semantics = [#tpu.dimension_semantics<parallel>], iteration_bounds = array<i64: 1>, scalar_prefetch = 0 : i64, scratch_operands = 0 : i64, tpu.core_type = #tpu.core_type<tc>, window_params = [{transform_indices = @transform_0, window_bounds = array<i64: 8, 8>}, {pipeline_mode = #tpu.pipeline_mode<synchronous>, transform_indices = @transform_1, window_bounds = array<i64: 520, 128>}, {pipeline_mode = #tpu.pipeline_mode<synchronous>, transform_indices = @transform_2, window_bounds = array<i64: 8, 128>}, {transform_indices = @transform_3, window_bounds = array<i64: 8, 16>}, {transform_indices = @transform_4, window_bounds = array<i64: 8, 32>}]} {
    %c0 = arith.constant 0 : index
    %c0_0 = arith.constant 0 : index
    %0 = vector.load %arg1[%c0, %c0_0] : memref<8x8xf32, #tpu.memory_space<vmem>>, vector<8x8xf32>
    %c0_1 = arith.constant 0 : index
    %c0_2 = arith.constant 0 : index
    %1 = vector.load %arg2[%c0_1, %c0_2] : memref<520x128xf32, #tpu.memory_space<vmem>>, vector<8x128xf32>
    %cst = arith.constant dense<0.000000e+00> : vector<8x128xf32>
    %2 = tpu.matmul %0, %1, %cst {dimension_numbers = #tpu.dot_dimension_numbers<[1], [0], [0], [1], [0, 0, 1, 1], [], []>} : vector<8x8xf32>, vector<8x128xf32>, vector<8x128xf32> -> vector<8x128xf32>
    %c0_3 = arith.constant 0 : index
    %c0_4 = arith.constant 0 : index
    %3 = vector.load %arg3[%c0_3, %c0_4] : memref<8x128xf32, #tpu.memory_space<vmem>>, vector<1x128xf32>
    %4 = vector.broadcast %3 : vector<1x128xf32> to vector<8x128xf32>
    %5 = arith.addf %2, %4 : vector<8x128xf32>
    %cst_5 = arith.constant 0.000000e+00 : f32
    %6 = vector.broadcast %cst_5 : f32 to vector<8x128xf32>
    %7 = arith.maximumf %5, %6 : vector<8x128xf32>
    %c8 = arith.constant 8 : index
    %c0_6 = arith.constant 0 : index
    %8 = vector.load %arg2[%c8, %c0_6] : memref<520x128xf32, #tpu.memory_space<vmem>>, vector<128x128xf32>
    %cst_7 = arith.constant dense<0.000000e+00> : vector<8x128xf32>
    %9 = tpu.matmul %7, %8, %cst_7 {dimension_numbers = #tpu.dot_dimension_numbers<[1], [0], [0], [1], [0, 0, 1, 1], [], []>} : vector<8x128xf32>, vector<128x128xf32>, vector<8x128xf32> -> vector<8x128xf32>
    %c1 = arith.constant 1 : index
    %c0_8 = arith.constant 0 : index
    %10 = vector.load %arg3[%c1, %c0_8] : memref<8x128xf32, #tpu.memory_space<vmem>>, vector<1x128xf32>
    %11 = vector.broadcast %10 : vector<1x128xf32> to vector<8x128xf32>
    %12 = arith.addf %9, %11 : vector<8x128xf32>
    %cst_9 = arith.constant 0.000000e+00 : f32
    %13 = vector.broadcast %cst_9 : f32 to vector<8x128xf32>
    %14 = arith.maximumf %12, %13 : vector<8x128xf32>
    %c136 = arith.constant 136 : index
    %c0_10 = arith.constant 0 : index
    %15 = vector.load %arg2[%c136, %c0_10] : memref<520x128xf32, #tpu.memory_space<vmem>>, vector<128x128xf32>
    %cst_11 = arith.constant dense<0.000000e+00> : vector<8x128xf32>
    %16 = tpu.matmul %14, %15, %cst_11 {dimension_numbers = #tpu.dot_dimension_numbers<[1], [0], [0], [1], [0, 0, 1, 1], [], []>} : vector<8x128xf32>, vector<128x128xf32>, vector<8x128xf32> -> vector<8x128xf32>
    %c2 = arith.constant 2 : index
    %c0_12 = arith.constant 0 : index
    %17 = vector.load %arg3[%c2, %c0_12] : memref<8x128xf32, #tpu.memory_space<vmem>>, vector<1x128xf32>
    %18 = vector.broadcast %17 : vector<1x128xf32> to vector<8x128xf32>
    %19 = arith.addf %16, %18 : vector<8x128xf32>
    %cst_13 = arith.constant 0.000000e+00 : f32
    %20 = vector.broadcast %cst_13 : f32 to vector<8x128xf32>
    %21 = arith.maximumf %19, %20 : vector<8x128xf32>
    %c264 = arith.constant 264 : index
    %c0_14 = arith.constant 0 : index
    %22 = vector.load %arg2[%c264, %c0_14] : memref<520x128xf32, #tpu.memory_space<vmem>>, vector<128x16xf32>
    %cst_15 = arith.constant dense<0.000000e+00> : vector<8x16xf32>
    %23 = tpu.matmul %21, %22, %cst_15 {dimension_numbers = #tpu.dot_dimension_numbers<[1], [0], [0], [1], [0, 0, 1, 1], [], []>} : vector<8x128xf32>, vector<128x16xf32>, vector<8x16xf32> -> vector<8x16xf32>
    %c3 = arith.constant 3 : index
    %c0_16 = arith.constant 0 : index
    %24 = vector.load %arg3[%c3, %c0_16] : memref<8x128xf32, #tpu.memory_space<vmem>>, vector<1x16xf32>
    %25 = vector.broadcast %24 : vector<1x16xf32> to vector<8x16xf32>
    %26 = arith.addf %23, %25 : vector<8x16xf32>
    %c0_17 = arith.constant 0 : index
    %c0_18 = arith.constant 0 : index
    %27 = vector.load %arg4[%c0_17, %c0_18] : memref<8x16xf32, #tpu.memory_space<vmem>>, vector<8x16xf32>
    tpu.vector_store %arg4[%c0_17, %c0_18], %26 {strides = array<i32>} : memref<8x16xf32, #tpu.memory_space<vmem>>, vector<8x16xf32>,
    %c392 = arith.constant 392 : index
    %c0_19 = arith.constant 0 : index
    %28 = vector.load %arg2[%c392, %c0_19] : memref<520x128xf32, #tpu.memory_space<vmem>>, vector<128x32xf32>
    %cst_20 = arith.constant dense<0.000000e+00> : vector<8x32xf32>
    %29 = tpu.matmul %21, %28, %cst_20 {dimension_numbers = #tpu.dot_dimension_numbers<[1], [0], [0], [1], [0, 0, 1, 1], [], []>} : vector<8x128xf32>, vector<128x32xf32>, vector<8x32xf32> -> vector<8x32xf32>
    %c4 = arith.constant 4 : index
    %c0_21 = arith.constant 0 : index
    %30 = vector.load %arg3[%c4, %c0_21] : memref<8x128xf32, #tpu.memory_space<vmem>>, vector<1x32xf32>
    %31 = vector.broadcast %30 : vector<1x32xf32> to vector<8x32xf32>
    %32 = arith.addf %29, %31 : vector<8x32xf32>
    %c0_22 = arith.constant 0 : index
    %c0_23 = arith.constant 0 : index
    %33 = vector.load %arg5[%c0_22, %c0_23] : memref<8x32xf32, #tpu.memory_space<vmem>>, vector<8x32xf32>
    tpu.vector_store %arg5[%c0_22, %c0_23], %32 {strides = array<i32>} : memref<8x32xf32, #tpu.memory_space<vmem>>, vector<8x32xf32>,
    return
  }
  func.func @transform_0(%arg0: i32) -> (i32, i32) {
    %c0_i32 = arith.constant 0 : i32
    %c0_i32_0 = arith.constant 0 : i32
    return %arg0, %c0_i32 : i32, i32
  }
  func.func @transform_1(%arg0: i32) -> (i32, i32) {
    %c0_i32 = arith.constant 0 : i32
    %c0_i32_0 = arith.constant 0 : i32
    %c0_i32_1 = arith.constant 0 : i32
    return %c0_i32, %c0_i32_0 : i32, i32
  }
  func.func @transform_2(%arg0: i32) -> (i32, i32) {
    %c0_i32 = arith.constant 0 : i32
    %c0_i32_0 = arith.constant 0 : i32
    %c0_i32_1 = arith.constant 0 : i32
    return %c0_i32, %c0_i32_0 : i32, i32
  }
  func.func @transform_3(%arg0: i32) -> (i32, i32) {
    %c0_i32 = arith.constant 0 : i32
    %c0_i32_0 = arith.constant 0 : i32
    return %arg0, %c0_i32 : i32, i32
  }
  func.func @transform_4(%arg0: i32) -> (i32, i32) {
    %c0_i32 = arith.constant 0 : i32
    %c0_i32_0 = arith.constant 0 : i32
    return %arg0, %c0_i32 : i32, i32
  }
}

</mosaic_0001>

<llo_original>
// kernel: tpu_custom_call.1
$region0: #{tpu_custom_call.1}
  #allocation0 [shape = 'u32[]', space=smem, size = 0x4, offset = 0x4, fixed_abs, tag = 'smem constant byte address 0x4 - core index']
  #allocation1 [shape = 'u32[144,128]{1,0:T(1,128)}', space=vmem, size = 0x12000, scoped, tag = 'internal scratch']
  %s0 = inlined_call_operand.hbm [shape: f32[8,8], index: 0, kind: input, shape index: {}]
  %s1 = inlined_call_operand.hbm [shape: f32[520,128], index: 1, kind: input, shape index: {}]
  %s2 = inlined_call_operand.hbm [shape: f32[8,128], index: 2, kind: input, shape index: {}]
  %s3 = inlined_call_operand.hbm [shape: f32[8,16], index: 3, kind: output, shape index: {0}]
  %s4 = inlined_call_operand.hbm [shape: f32[8,32], index: 4, kind: output, shape index: {1}]
  %5 = xla_tuple %s3, %s4
  %s6 = sld [smem:[#allocation0]]
  $region42: #{tpu_custom_call.1} parent=0
    _
  %s8 = ssub.s32 1, %s6
  %s9 = scalar_select 0, %s8, %s6
  $region1: #{tpu_custom_call.1} parent=0
    #allocation2 [shape = 'u8[4096]{0}', space=vmem, size = 0x1000, scoped, tag = 'input window, operand 0, single buffered']
    #allocation3 [shape = 's32[1]{0}', space=sflag, size = 0x4, scoped, tag = 'scoped memory for tpu_custom_call.1']
    #allocation4 [shape = 's32[1]{0}', space=sflag, size = 0x4, scoped, tag = 'scoped memory for tpu_custom_call.1']
    #allocation5 [shape = 'u8[266240]{0}', space=vmem, size = 0x41000, scoped, tag = 'input window, operand 1, single buffered']
    #allocation6 [shape = 's32[1]{0}', space=sflag, size = 0x4, scoped, tag = 'scoped memory for tpu_custom_call.1']
    #allocation7 [shape = 'u8[4096]{0}', space=vmem, size = 0x1000, scoped, tag = 'input window, operand 2, single buffered']
    #allocation8 [shape = 'u8[4096]{0}', space=vmem, size = 0x1000, scoped, tag = 'output window, operand 0, single buffered']
    #allocation9 [shape = 'u8[4096]{0}', space=vmem, size = 0x1000, scoped, tag = 'output window, operand 1, single buffered']
    #allocation10 [shape = 's32[1]{0}', space=sflag, size = 0x4, scoped, tag = 'scoped memory for tpu_custom_call.1']
    %10 = vsyncpa [#allocation3], 0
    %11 = vsyncpa [#allocation6], 0
    %12 = vsyncpa [#allocation4], 0
    %13 = vsyncpa [#allocation10], 0
    // Predicated region
    $region2: #{tpu_custom_call.1} parent=1 // pred_check
      _
    $region3: #{tpu_custom_call.1} parent=1 // pred_check_branch
      %15 = sbr.rel (0) target = $region5
    $region4: #{tpu_custom_call.1} parent=1 // pred_region
      %s17 = ssub.s32 128, 128
      %18 = vsyncadd [#allocation3], %s17
      %s20 = sshll.u32 [#allocation2], 4
      %s21 = int_to_ptr.vmem [resolvable:$true] %s20
      %23 = dma.hbm_to_vmem [thread:$0]  %s0, 128, %s21, [#allocation3]
    $region5: #{tpu_custom_call.1} parent=1 // pred_fallthru
      _
    // Predicated region
    $region6: #{tpu_custom_call.1} parent=1 // pred_check
      _
    $region7: #{tpu_custom_call.1} parent=1 // pred_check_branch
      %25 = sbr.rel (0) target = $region9
    $region8: #{tpu_custom_call.1} parent=1 // pred_region
      %s27 = ssub.s32 8320, 8320
      %28 = vsyncadd [#allocation6], %s27
      %s29 = sshll.u32 [#allocation5], 4
      %s30 = int_to_ptr.vmem [resolvable:$true] %s29
      %35 = dma.hbm_to_vmem [thread:$0]  %s1, 8320, %s30, [#allocation6], 128, 128, 8
    $region9: #{tpu_custom_call.1} parent=1 // pred_fallthru
      _
    // Predicated region
    $region10: #{tpu_custom_call.1} parent=1 // pred_check
      _
    $region11: #{tpu_custom_call.1} parent=1 // pred_check_branch
      %37 = sbr.rel (0) target = $region13
    $region12: #{tpu_custom_call.1} parent=1 // pred_region
      %s39 = ssub.s32 128, 128
      %40 = vsyncadd [#allocation6], %s39
      %s42 = sshll.u32 [#allocation7], 4
      %s43 = int_to_ptr.vmem [resolvable:$true] %s42
      %45 = dma.hbm_to_vmem [thread:$0]  %s2, 128, %s43, [#allocation6]
    $region13: #{tpu_custom_call.1} parent=1 // pred_fallthru
      _
    // Predicated region
    $region14: #{tpu_custom_call.1} parent=1 // pred_check
      _
    $region15: #{tpu_custom_call.1} parent=1 // pred_check_branch
      %47 = sbr.rel (0) target = $region17
    $region16: #{tpu_custom_call.1} parent=1 // pred_region
      %48 = dma.done [#allocation3], 128
    $region17: #{tpu_custom_call.1} parent=1 // pred_fallthru
      _
    // Predicated region
    $region18: #{tpu_custom_call.1} parent=1 // pred_check
      _
    $region19: #{tpu_custom_call.1} parent=1 // pred_check_branch
      %50 = sbr.rel (0) target = $region21
    $region20: #{tpu_custom_call.1} parent=1 // pred_region
      %51 = dma.done [#allocation6], 8320
    $region21: #{tpu_custom_call.1} parent=1 // pred_fallthru
      _
    // Predicated region
    $region22: #{tpu_custom_call.1} parent=1 // pred_check
      _
    $region23: #{tpu_custom_call.1} parent=1 // pred_check_branch
      %53 = sbr.rel (0) target = $region25
    $region24: #{tpu_custom_call.1} parent=1 // pred_region
      %54 = dma.done [#allocation6], 128
    $region25: #{tpu_custom_call.1} parent=1 // pred_fallthru
      _
    %v55 = vld [vmem:[#allocation2] sm:$0xff]
    %v56 = vld [vmem:[#allocation5] sm:$0xff]
    %v57 = vld [vmem:[#allocation7] sm:$0x1]
    %v58 = vlaneseq
    %v59 = vshrl.u32 %v58, 7
    %v60 = vsub.s32 0, %v59
    %v61 = vrot.slane %v57, %v60
    %vm62 = vcmask 64512
    %v64 = vsel %vm62, %v55, 0
    %66 = vmatprep.subr.mxu0 0.0
    %67 = vmatpush1.msra.mxu0 %v56
    %68 = vmatprep.subr.mxu0 0.0
    %69 = vmatpush1.msra.mxu0 0.0
    %70 = vmatprep.subr.mxu0 0.0
    %71 = vmatpush1.msra.mxu0 0.0
    %72 = vmatprep.subr.mxu0 0.0
    %73 = vmatpush1.msra.mxu0 0.0
    %74 = vmatprep.subr.mxu0 0.0
    %75 = vmatpush1.msra.mxu0 0.0
    %76 = vmatprep.subr.mxu0 0.0
    %77 = vmatpush1.msra.mxu0 0.0
    %78 = vmatprep.subr.mxu0 0.0
    %79 = vmatpush1.msra.mxu0 0.0
    %80 = vmatprep.subr.mxu0 0.0
    %81 = vmatpush1.msra.mxu0 0.0
    %82 = vmatprep.subr.mxu0 0.0
    %83 = vmatpush1.msra.mxu0 0.0
    %84 = vmatprep.subr.mxu0 0.0
    %85 = vmatpush1.msra.mxu0 0.0
    %86 = vmatprep.subr.mxu0 0.0
    %87 = vmatpush1.msra.mxu0 0.0
    %88 = vmatprep.subr.mxu0 0.0
    %89 = vmatpush1.msra.mxu0 0.0
    %90 = vmatprep.subr.mxu0 0.0
    %91 = vmatpush1.msra.mxu0 0.0
    %92 = vmatprep.subr.mxu0 0.0
    %93 = vmatpush1.msra.mxu0 0.0
    %94 = vmatprep.subr.mxu0 0.0
    %95 = vmatpush1.msra.mxu0 0.0
    %96 = vmatprep.subr.mxu0 0.0
    %97 = vmatpush1.msra.mxu0 0.0
    %98 = vmatprep.subr.mxu0 0.0
    %99 = vmatpush1.msra.mxu0 0.0
    %100 = vmatprep.subr.mxu0 0.0
    %101 = vmatpush1.msra.mxu0 0.0
    %102 = vmatprep.subr.mxu0 0.0
    %103 = vmatpush1.msra.mxu0 0.0
    %104 = vmatprep.subr.mxu0 0.0
    %105 = vmatpush1.msra.mxu0 0.0
    %106 = vmatprep.subr.mxu0 0.0
    %107 = vmatpush1.msra.mxu0 0.0
    %108 = vmatprep.subr.mxu0 0.0
    %109 = vmatpush1.msra.mxu0 0.0
    %110 = vmatprep.subr.mxu0 0.0
    %111 = vmatpush1.msra.mxu0 0.0
    %112 = vmatprep.subr.mxu0 0.0
    %113 = vmatpush1.msra.mxu0 0.0
    %114 = vmatprep.subr.mxu0 0.0
    %115 = vmatpush1.msra.mxu0 0.0
    %116 = vmatprep.subr.mxu0 0.0
    %117 = vmatpush1.msra.mxu0 0.0
    %118 = vmatprep.subr.mxu0 0.0
    %119 = vmatpush1.msra.mxu0 0.0
    %120 = vmatprep.subr.mxu0 0.0
    %121 = vmatpush1.msra.mxu0 0.0
    %122 = vmatprep.subr.mxu0 0.0
    %123 = vmatpush1.msra.mxu0 0.0
    %124 = vmatprep.subr.mxu0 0.0
    %125 = vmatpush1.msra.mxu0 0.0
    %126 = vmatprep.subr.mxu0 0.0
    %127 = vmatpush1.msra.mxu0 0.0
    %128 = vmatprep.subr.mxu0 0.0
    %129 = vmatpush1.msra.mxu0 0.0
    %130 = vmatprep.mubr.f32.mxu0 0.0
    %131 = vmatmul.mubr.f32.gmra.mrb[0].mxu0 %v64
    %v132 = vpop.f32.mrb[0].mxu0
    %v133 = vadd.f32 %v61, %v132
    %v134 = vpop.f32.mrb[0].mxu0
    %135 = vdwg.mxu0
    %v136 = vmax.f32 %v133, 0.0
    %v137 = vld [vmem:[#allocation5 + $0x8] sm:$0xff]
    %v138 = vld [vmem:[#allocation5 + $0x10] sm:$0xff]
    %v139 = vld [vmem:[#allocation5 + $0x18] sm:$0xff]
    %v140 = vld [vmem:[#allocation5 + $0x20] sm:$0xff]
    %v141 = vld [vmem:[#allocation5 + $0x28] sm:$0xff]
    %v142 = vld [vmem:[#allocation5 + $0x30] sm:$0xff]
    %v143 = vld [vmem:[#allocation5 + $0x38] sm:$0xff]
    %v144 = vld [vmem:[#allocation5 + $0x40] sm:$0xff]
    %v145 = vld [vmem:[#allocation5 + $0x48] sm:$0xff]
    %v146 = vld [vmem:[#allocation5 + $0x50] sm:$0xff]
    %v147 = vld [vmem:[#allocation5 + $0x58] sm:$0xff]
    %v148 = vld [vmem:[#allocation5 + $0x60] sm:$0xff]
    %v149 = vld [vmem:[#allocation5 + $0x68] sm:$0xff]
    %v150 = vld [vmem:[#allocation5 + $0x70] sm:$0xff]
    %v151 = vld [vmem:[#allocation5 + $0x78] sm:$0xff]
    %v152 = vld [vmem:[#allocation5 + $0x80] sm:$0xff]
    %v153 = vld [vmem:[#allocation7 + $0x1] sm:$0x1]
    %v154 = vlaneseq
    %v155 = vshrl.u32 %v154, 7
    %v156 = vsub.s32 0, %v155
    %v157 = vrot.slane %v153, %v156
    %158 = vmatprep.subr.mxu0 0.0
    %159 = vmatpush1.msra.mxu0 %v137
    %160 = vmatprep.subr.mxu0 0.0
    %161 = vmatpush1.msra.mxu0 %v138
    %162 = vmatprep.subr.mxu0 0.0
    %163 = vmatpush1.msra.mxu0 %v139
    %164 = vmatprep.subr.mxu0 0.0
    %165 = vmatpush1.msra.mxu0 %v140
    %166 = vmatprep.subr.mxu0 0.0
    %167 = vmatpush1.msra.mxu0 %v141
    %168 = vmatprep.subr.mxu0 0.0
    %169 = vmatpush1.msra.mxu0 %v142
    %170 = vmatprep.subr.mxu0 0.0
    %171 = vmatpush1.msra.mxu0 %v143
    %172 = vmatprep.subr.mxu0 0.0
    %173 = vmatpush1.msra.mxu0 %v144
    %174 = vmatprep.subr.mxu0 0.0
    %175 = vmatpush1.msra.mxu0 %v145
    %176 = vmatprep.subr.mxu0 0.0
    %177 = vmatpush1.msra.mxu0 %v146
    %178 = vmatprep.subr.mxu0 0.0
    %179 = vmatpush1.msra.mxu0 %v147
    %180 = vmatprep.subr.mxu0 0.0
    %181 = vmatpush1.msra.mxu0 %v148
    %182 = vmatprep.subr.mxu0 0.0
    %183 = vmatpush1.msra.mxu0 %v149
    %184 = vmatprep.subr.mxu0 0.0
    %185 = vmatpush1.msra.mxu0 %v150
    %186 = vmatprep.subr.mxu0 0.0
    %187 = vmatpush1.msra.mxu0 %v151
    %188 = vmatprep.subr.mxu0 0.0
    %189 = vmatpush1.msra.mxu0 %v152
    %190 = vmatprep.subr.mxu0 0.0
    %191 = vmatpush1.msra.mxu0 0.0
    %192 = vmatprep.subr.mxu0 0.0
    %193 = vmatpush1.msra.mxu0 0.0
    %194 = vmatprep.subr.mxu0 0.0
    %195 = vmatpush1.msra.mxu0 0.0
    %196 = vmatprep.subr.mxu0 0.0
    %197 = vmatpush1.msra.mxu0 0.0
    %198 = vmatprep.subr.mxu0 0.0
    %199 = vmatpush1.msra.mxu0 0.0
    %200 = vmatprep.subr.mxu0 0.0
    %201 = vmatpush1.msra.mxu0 0.0
    %202 = vmatprep.subr.mxu0 0.0
    %203 = vmatpush1.msra.mxu0 0.0
    %204 = vmatprep.subr.mxu0 0.0
    %205 = vmatpush1.msra.mxu0 0.0
    %206 = vmatprep.subr.mxu0 0.0
    %207 = vmatpush1.msra.mxu0 0.0
    %208 = vmatprep.subr.mxu0 0.0
    %209 = vmatpush1.msra.mxu0 0.0
    %210 = vmatprep.subr.mxu0 0.0
    %211 = vmatpush1.msra.mxu0 0.0
    %212 = vmatprep.subr.mxu0 0.0
    %213 = vmatpush1.msra.mxu0 0.0
    %214 = vmatprep.subr.mxu0 0.0
    %215 = vmatpush1.msra.mxu0 0.0
    %216 = vmatprep.subr.mxu0 0.0
    %217 = vmatpush1.msra.mxu0 0.0
    %218 = vmatprep.subr.mxu0 0.0
    %219 = vmatpush1.msra.mxu0 0.0
    %220 = vmatprep.subr.mxu0 0.0
    %221 = vmatpush1.msra.mxu0 0.0
    %222 = vmatprep.mubr.f32.mxu0 0.0
    %223 = vmatmul.mubr.f32.gmra.mrb[0].mxu0 %v136
    %v224 = vpop.f32.mrb[0].mxu0
    %v225 = vadd.f32 %v157, %v224
    %v226 = vpop.f32.mrb[0].mxu0
    %227 = vdwg.mxu0
    %v228 = vmax.f32 %v225, 0.0
    %v229 = vld [vmem:[#allocation5 + $0x88] sm:$0xff]
    %v230 = vld [vmem:[#allocation5 + $0x90] sm:$0xff]
    %v231 = vld [vmem:[#allocation5 + $0x98] sm:$0xff]
    %v232 = vld [vmem:[#allocation5 + $0xa0] sm:$0xff]
    %v233 = vld [vmem:[#allocation5 + $0xa8] sm:$0xff]
    %v234 = vld [vmem:[#allocation5 + $0xb0] sm:$0xff]
    %v235 = vld [vmem:[#allocation5 + $0xb8] sm:$0xff]
    %v236 = vld [vmem:[#allocation5 + $0xc0] sm:$0xff]
    %v237 = vld [vmem:[#allocation5 + $0xc8] sm:$0xff]
    %v238 = vld [vmem:[#allocation5 + $0xd0] sm:$0xff]
    %v239 = vld [vmem:[#allocation5 + $0xd8] sm:$0xff]
    %v240 = vld [vmem:[#allocation5 + $0xe0] sm:$0xff]
    %v241 = vld [vmem:[#allocation5 + $0xe8] sm:$0xff]
    %v242 = vld [vmem:[#allocation5 + $0xf0] sm:$0xff]
    %v243 = vld [vmem:[#allocation5 + $0xf8] sm:$0xff]
    %v244 = vld [vmem:[#allocation5 + $0x100] sm:$0xff]
    %v245 = vld [vmem:[#allocation7 + $0x2] sm:$0x1]
    %v246 = vlaneseq
    %v247 = vshrl.u32 %v246, 7
    %v248 = vsub.s32 0, %v247
    %v249 = vrot.slane %v245, %v248
    %250 = vmatprep.subr.mxu0 0.0
    %251 = vmatpush1.msra.mxu0 %v229
    %252 = vmatprep.subr.mxu0 0.0
    %253 = vmatpush1.msra.mxu0 %v230
    %254 = vmatprep.subr.mxu0 0.0
    %255 = vmatpush1.msra.mxu0 %v231
    %256 = vmatprep.subr.mxu0 0.0
    %257 = vmatpush1.msra.mxu0 %v232
    %258 = vmatprep.subr.mxu0 0.0
    %259 = vmatpush1.msra.mxu0 %v233
    %260 = vmatprep.subr.mxu0 0.0
    %261 = vmatpush1.msra.mxu0 %v234
    %262 = vmatprep.subr.mxu0 0.0
    %263 = vmatpush1.msra.mxu0 %v235
    %264 = vmatprep.subr.mxu0 0.0
    %265 = vmatpush1.msra.mxu0 %v236
    %266 = vmatprep.subr.mxu0 0.0
    %267 = vmatpush1.msra.mxu0 %v237
    %268 = vmatprep.subr.mxu0 0.0
    %269 = vmatpush1.msra.mxu0 %v238
    %270 = vmatprep.subr.mxu0 0.0
    %271 = vmatpush1.msra.mxu0 %v239
    %272 = vmatprep.subr.mxu0 0.0
    %273 = vmatpush1.msra.mxu0 %v240
    %274 = vmatprep.subr.mxu0 0.0
    %275 = vmatpush1.msra.mxu0 %v241
    %276 = vmatprep.subr.mxu0 0.0
    %277 = vmatpush1.msra.mxu0 %v242
    %278 = vmatprep.subr.mxu0 0.0
    %279 = vmatpush1.msra.mxu0 %v243
    %280 = vmatprep.subr.mxu0 0.0
    %281 = vmatpush1.msra.mxu0 %v244
    %282 = vmatprep.subr.mxu0 0.0
    %283 = vmatpush1.msra.mxu0 0.0
    %284 = vmatprep.subr.mxu0 0.0
    %285 = vmatpush1.msra.mxu0 0.0
    %286 = vmatprep.subr.mxu0 0.0
    %287 = vmatpush1.msra.mxu0 0.0
    %288 = vmatprep.subr.mxu0 0.0
    %289 = vmatpush1.msra.mxu0 0.0
    %290 = vmatprep.subr.mxu0 0.0
    %291 = vmatpush1.msra.mxu0 0.0
    %292 = vmatprep.subr.mxu0 0.0
    %293 = vmatpush1.msra.mxu0 0.0
    %294 = vmatprep.subr.mxu0 0.0
    %295 = vmatpush1.msra.mxu0 0.0
    %296 = vmatprep.subr.mxu0 0.0
    %297 = vmatpush1.msra.mxu0 0.0
    %298 = vmatprep.subr.mxu0 0.0
    %299 = vmatpush1.msra.mxu0 0.0
    %300 = vmatprep.subr.mxu0 0.0
    %301 = vmatpush1.msra.mxu0 0.0
    %302 = vmatprep.subr.mxu0 0.0
    %303 = vmatpush1.msra.mxu0 0.0
    %304 = vmatprep.subr.mxu0 0.0
    %305 = vmatpush1.msra.mxu0 0.0
    %306 = vmatprep.subr.mxu0 0.0
    %307 = vmatpush1.msra.mxu0 0.0
    %308 = vmatprep.subr.mxu0 0.0
    %309 = vmatpush1.msra.mxu0 0.0
    %310 = vmatprep.subr.mxu0 0.0
    %311 = vmatpush1.msra.mxu0 0.0
    %312 = vmatprep.subr.mxu0 0.0
    %313 = vmatpush1.msra.mxu0 0.0
    %314 = vmatprep.mubr.f32.mxu0 0.0
    %315 = vmatmul.mubr.f32.gmra.mrb[0].mxu0 %v228
    %v316 = vpop.f32.mrb[0].mxu0
    %v317 = vadd.f32 %v249, %v316
    %v318 = vpop.f32.mrb[0].mxu0
    %319 = vdwg.mxu0
    %v320 = vmax.f32 %v317, 0.0
    %v321 = vld [vmem:[#allocation5 + $0x108] sm:$0xff]
    %v322 = vld [vmem:[#allocation5 + $0x110] sm:$0xff]
    %v323 = vld [vmem:[#allocation5 + $0x118] sm:$0xff]
    %v324 = vld [vmem:[#allocation5 + $0x120] sm:$0xff]
    %v325 = vld [vmem:[#allocation5 + $0x128] sm:$0xff]
    %v326 = vld [vmem:[#allocation5 + $0x130] sm:$0xff]
    %v327 = vld [vmem:[#allocation5 + $0x138] sm:$0xff]
    %v328 = vld [vmem:[#allocation5 + $0x140] sm:$0xff]
    %v329 = vld [vmem:[#allocation5 + $0x148] sm:$0xff]
    %v330 = vld [vmem:[#allocation5 + $0x150] sm:$0xff]
    %v331 = vld [vmem:[#allocation5 + $0x158] sm:$0xff]
    %v332 = vld [vmem:[#allocation5 + $0x160] sm:$0xff]
    %v333 = vld [vmem:[#allocation5 + $0x168] sm:$0xff]
    %v334 = vld [vmem:[#allocation5 + $0x170] sm:$0xff]
    %v335 = vld [vmem:[#allocation5 + $0x178] sm:$0xff]
    %v336 = vld [vmem:[#allocation5 + $0x180] sm:$0xff]
    %v337 = vld [vmem:[#allocation7 + $0x3] sm:$0x1]
    %v338 = vlaneseq
    %v339 = vshrl.u32 %v338, 7
    %v340 = vsub.s32 0, %v339
    %v341 = vrot.slane %v337, %v340
    %342 = vmatprep.subr.mxu0 0.0
    %343 = vmatpush1.msra.mxu0 %v321
    %344 = vmatprep.subr.mxu0 0.0
    %345 = vmatpush1.msra.mxu0 %v322
    %346 = vmatprep.subr.mxu0 0.0
    %347 = vmatpush1.msra.mxu0 %v323
    %348 = vmatprep.subr.mxu0 0.0
    %349 = vmatpush1.msra.mxu0 %v324
    %350 = vmatprep.subr.mxu0 0.0
    %351 = vmatpush1.msra.mxu0 %v325
    %352 = vmatprep.subr.mxu0 0.0
    %353 = vmatpush1.msra.mxu0 %v326
    %354 = vmatprep.subr.mxu0 0.0
    %355 = vmatpush1.msra.mxu0 %v327
    %356 = vmatprep.subr.mxu0 0.0
    %357 = vmatpush1.msra.mxu0 %v328
    %358 = vmatprep.subr.mxu0 0.0
    %359 = vmatpush1.msra.mxu0 %v329
    %360 = vmatprep.subr.mxu0 0.0
    %361 = vmatpush1.msra.mxu0 %v330
    %362 = vmatprep.subr.mxu0 0.0
    %363 = vmatpush1.msra.mxu0 %v331
    %364 = vmatprep.subr.mxu0 0.0
    %365 = vmatpush1.msra.mxu0 %v332
    %366 = vmatprep.subr.mxu0 0.0
    %367 = vmatpush1.msra.mxu0 %v333
    %368 = vmatprep.subr.mxu0 0.0
    %369 = vmatpush1.msra.mxu0 %v334
    %370 = vmatprep.subr.mxu0 0.0
    %371 = vmatpush1.msra.mxu0 %v335
    %372 = vmatprep.subr.mxu0 0.0
    %373 = vmatpush1.msra.mxu0 %v336
    %374 = vmatprep.subr.mxu0 0.0
    %375 = vmatpush1.msra.mxu0 0.0
    %376 = vmatprep.subr.mxu0 0.0
    %377 = vmatpush1.msra.mxu0 0.0
    %378 = vmatprep.subr.mxu0 0.0
    %379 = vmatpush1.msra.mxu0 0.0
    %380 = vmatprep.subr.mxu0 0.0
    %381 = vmatpush1.msra.mxu0 0.0
    %382 = vmatprep.subr.mxu0 0.0
    %383 = vmatpush1.msra.mxu0 0.0
    %384 = vmatprep.subr.mxu0 0.0
    %385 = vmatpush1.msra.mxu0 0.0
    %386 = vmatprep.subr.mxu0 0.0
    %387 = vmatpush1.msra.mxu0 0.0
    %388 = vmatprep.subr.mxu0 0.0
    %389 = vmatpush1.msra.mxu0 0.0
    %390 = vmatprep.subr.mxu0 0.0
    %391 = vmatpush1.msra.mxu0 0.0
    %392 = vmatprep.subr.mxu0 0.0
    %393 = vmatpush1.msra.mxu0 0.0
    %394 = vmatprep.subr.mxu0 0.0
    %395 = vmatpush1.msra.mxu0 0.0
    %396 = vmatprep.subr.mxu0 0.0
    %397 = vmatpush1.msra.mxu0 0.0
    %398 = vmatprep.subr.mxu0 0.0
    %399 = vmatpush1.msra.mxu0 0.0
    %400 = vmatprep.subr.mxu0 0.0
    %401 = vmatpush1.msra.mxu0 0.0
    %402 = vmatprep.subr.mxu0 0.0
    %403 = vmatpush1.msra.mxu0 0.0
    %404 = vmatprep.subr.mxu0 0.0
    %405 = vmatpush1.msra.mxu0 0.0
    %406 = vmatprep.mubr.f32.mxu0 0.0
    %407 = vmatmul.mubr.f32.gmra.mrb[0].mxu0 %v320
    %v408 = vpop.f32.mrb[0].mxu0
    %v409 = vadd.f32 %v341, %v408
    %v410 = vpop.f32.mrb[0].mxu0
    %411 = vdwg.mxu0
    %vm412 = vcmask 130048
    %413 = vst.msk [vmem:[#allocation8] sm:$0xff] %vm412, %v409
    %v414 = vld [vmem:[#allocation5 + $0x188] sm:$0xff]
    %v415 = vld [vmem:[#allocation5 + $0x190] sm:$0xff]
    %v416 = vld [vmem:[#allocation5 + $0x198] sm:$0xff]
    %v417 = vld [vmem:[#allocation5 + $0x1a0] sm:$0xff]
    %v418 = vld [vmem:[#allocation5 + $0x1a8] sm:$0xff]
    %v419 = vld [vmem:[#allocation5 + $0x1b0] sm:$0xff]
    %v420 = vld [vmem:[#allocation5 + $0x1b8] sm:$0xff]
    %v421 = vld [vmem:[#allocation5 + $0x1c0] sm:$0xff]
    %v422 = vld [vmem:[#allocation5 + $0x1c8] sm:$0xff]
    %v423 = vld [vmem:[#allocation5 + $0x1d0] sm:$0xff]
    %v424 = vld [vmem:[#allocation5 + $0x1d8] sm:$0xff]
    %v425 = vld [vmem:[#allocation5 + $0x1e0] sm:$0xff]
    %v426 = vld [vmem:[#allocation5 + $0x1e8] sm:$0xff]
    %v427 = vld [vmem:[#allocation5 + $0x1f0] sm:$0xff]
    %v428 = vld [vmem:[#allocation5 + $0x1f8] sm:$0xff]
    %v429 = vld [vmem:[#allocation5 + $0x200] sm:$0xff]
    %v430 = vld [vmem:[#allocation7 + $0x4] sm:$0x1]
    %v431 = vlaneseq
    %v432 = vshrl.u32 %v431, 7
    %v433 = vsub.s32 0, %v432
    %v434 = vrot.slane %v430, %v433
    %435 = vmatprep.subr.mxu0 0.0
    %436 = vmatpush1.msra.mxu0 %v414
    %437 = vmatprep.subr.mxu0 0.0
    %438 = vmatpush1.msra.mxu0 %v415
    %439 = vmatprep.subr.mxu0 0.0
    %440 = vmatpush1.msra.mxu0 %v416
    %441 = vmatprep.subr.mxu0 0.0
    %442 = vmatpush1.msra.mxu0 %v417
    %443 = vmatprep.subr.mxu0 0.0
    %444 = vmatpush1.msra.mxu0 %v418
    %445 = vmatprep.subr.mxu0 0.0
    %446 = vmatpush1.msra.mxu0 %v419
    %447 = vmatprep.subr.mxu0 0.0
    %448 = vmatpush1.msra.mxu0 %v420
    %449 = vmatprep.subr.mxu0 0.0
    %450 = vmatpush1.msra.mxu0 %v421
    %451 = vmatprep.subr.mxu0 0.0
    %452 = vmatpush1.msra.mxu0 %v422
    %453 = vmatprep.subr.mxu0 0.0
    %454 = vmatpush1.msra.mxu0 %v423
    %455 = vmatprep.subr.mxu0 0.0
    %456 = vmatpush1.msra.mxu0 %v424
    %457 = vmatprep.subr.mxu0 0.0
    %458 = vmatpush1.msra.mxu0 %v425
    %459 = vmatprep.subr.mxu0 0.0
    %460 = vmatpush1.msra.mxu0 %v426
    %461 = vmatprep.subr.mxu0 0.0
    %462 = vmatpush1.msra.mxu0 %v427
    %463 = vmatprep.subr.mxu0 0.0
    %464 = vmatpush1.msra.mxu0 %v428
    %465 = vmatprep.subr.mxu0 0.0
    %466 = vmatpush1.msra.mxu0 %v429
    %467 = vmatprep.subr.mxu0 0.0
    %468 = vmatpush1.msra.mxu0 0.0
    %469 = vmatprep.subr.mxu0 0.0
    %470 = vmatpush1.msra.mxu0 0.0
    %471 = vmatprep.subr.mxu0 0.0
    %472 = vmatpush1.msra.mxu0 0.0
    %473 = vmatprep.subr.mxu0 0.0
    %474 = vmatpush1.msra.mxu0 0.0
    %475 = vmatprep.subr.mxu0 0.0
    %476 = vmatpush1.msra.mxu0 0.0
    %477 = vmatprep.subr.mxu0 0.0
    %478 = vmatpush1.msra.mxu0 0.0
    %479 = vmatprep.subr.mxu0 0.0
    %480 = vmatpush1.msra.mxu0 0.0
    %481 = vmatprep.subr.mxu0 0.0
    %482 = vmatpush1.msra.mxu0 0.0
    %483 = vmatprep.subr.mxu0 0.0
    %484 = vmatpush1.msra.mxu0 0.0
    %485 = vmatprep.subr.mxu0 0.0
    %486 = vmatpush1.msra.mxu0 0.0
    %487 = vmatprep.subr.mxu0 0.0
    %488 = vmatpush1.msra.mxu0 0.0
    %489 = vmatprep.subr.mxu0 0.0
    %490 = vmatpush1.msra.mxu0 0.0
    %491 = vmatprep.subr.mxu0 0.0
    %492 = vmatpush1.msra.mxu0 0.0
    %493 = vmatprep.subr.mxu0 0.0
    %494 = vmatpush1.msra.mxu0 0.0
    %495 = vmatprep.subr.mxu0 0.0
    %496 = vmatpush1.msra.mxu0 0.0
    %497 = vmatprep.subr.mxu0 0.0
    %498 = vmatpush1.msra.mxu0 0.0
    %499 = vmatprep.mubr.f32.mxu0 0.0
    %500 = vmatmul.mubr.f32.gmra.mrb[0].mxu0 %v320
    %v501 = vpop.f32.mrb[0].mxu0
    %v502 = vadd.f32 %v434, %v501
    %v503 = vpop.f32.mrb[0].mxu0
    %504 = vdwg.mxu0
    %vm505 = vcmask 261120
    %506 = vst.msk [vmem:[#allocation9] sm:$0xff] %vm505, %v502
    // Predicated region
    $region26: #{tpu_custom_call.1} parent=1 // pred_check
      _
    $region27: #{tpu_custom_call.1} parent=1 // pred_check_branch
      %508 = sbr.rel (0) target = $region29
    $region28: #{tpu_custom_call.1} parent=1 // pred_region
      %s510 = ssub.s32 128, 128
      %511 = vsyncadd [#allocation4], %s510
      %s513 = sshll.u32 [#allocation8], 4
      %s514 = int_to_ptr.vmem [resolvable:$true] %s513
      %516 = dma.vmem_to_hbm [thread:$0]  %s514, 128, %s3, [#allocation4]
    $region29: #{tpu_custom_call.1} parent=1 // pred_fallthru
      _
    // Predicated region
    $region30: #{tpu_custom_call.1} parent=1 // pred_check
      _
    $region31: #{tpu_custom_call.1} parent=1 // pred_check_branch
      %518 = sbr.rel (0) target = $region33
    $region32: #{tpu_custom_call.1} parent=1 // pred_region
      %s520 = ssub.s32 128, 128
      %521 = vsyncadd [#allocation10], %s520
      %s523 = sshll.u32 [#allocation9], 4
      %s524 = int_to_ptr.vmem [resolvable:$true] %s523
      %526 = dma.vmem_to_hbm [thread:$0]  %s524, 128, %s4, [#allocation10]
    $region33: #{tpu_custom_call.1} parent=1 // pred_fallthru
      _
    // Predicated region
    $region34: #{tpu_custom_call.1} parent=1 // pred_check
      _
    $region35: #{tpu_custom_call.1} parent=1 // pred_check_branch
      %528 = sbr.rel (0) target = $region37
    $region36: #{tpu_custom_call.1} parent=1 // pred_region
      %529 = dma.done [#allocation4], 128
    $region37: #{tpu_custom_call.1} parent=1 // pred_fallthru
      _
    // Predicated region
    $region38: #{tpu_custom_call.1} parent=1 // pred_check
      _
    $region39: #{tpu_custom_call.1} parent=1 // pred_check_branch
      %531 = sbr.rel (0) target = $region41
    $region40: #{tpu_custom_call.1} parent=1 // pred_region
      %532 = dma.done [#allocation10], 128
    $region41: #{tpu_custom_call.1} parent=1 // pred_fallthru
      _
    %533 = vsyncpa [#allocation3], 1
    %534 = vsyncpa [#allocation6], 1
    %535 = vsyncpa [#allocation4], 1
    %536 = vsyncpa [#allocation10], 1

</llo_original>
